<compile_context>
chip_gen: v7x
topology: tpu7x:2x2x1
jax: 0.10.0
libtpu: 0.0.40
codegen_flags: <defaults>
</compile_context>

<pallas_src>
import jax
import jax.numpy as jnp
from jax.experimental import pallas as pl
from jax.experimental.pallas import tpu as pltpu


MEAN = 0.0     # module __init__ arg
SIGMA = 0.1    # module __init__ arg

_MAX_BLOCK_ROWS = 512   # ~2 MiB f32 per block at lane=1024; safe on v5e/v6e/v7x VMEM


def _choose_layout(total):
    """Pick a lane-dense (rows, lane) slab and a (8,128)-legal row tile."""
    for lane in (1024, 512, 256, 128):
        if total % lane == 0:
            rows = total // lane
            if rows <= _MAX_BLOCK_ROWS:
                return lane, rows, rows          # single block == full dims (legal)
            return lane, rows, _MAX_BLOCK_ROWS   # 512 rows: multiple of 8 (legal)
    raise ValueError("AddGaussian demo wrapper expects total elements divisible by 128")


# ---------------- TPU path: on-chip Gaussian noise ----------------

def _add_gaussian_kernel(seed_ref, x_ref, o_ref):
    """out = x + Normal(MEAN, SIGMA), noise drawn on-chip, unique stream per block."""
    pltpu.prng_seed(seed_ref[0] + pl.program_id(0))
    z = pltpu.stateful_normal(x_ref.shape, jnp.float32)
    noise = jnp.float32(MEAN) + jnp.float32(SIGMA) * z
    o_ref[...] = x_ref[...] + noise.astype(o_ref.dtype)


# ---------------- Fallback path (non-TPU backends): precomputed noise ----------------

def _add_noise_kernel(x_ref, n_ref, o_ref):
    o_ref[...] = x_ref[...] + n_ref[...]


def add_gaussian(x, seed, *, training=True):
    """x: float32 NCHW array. seed: python int. Returns same shape/dtype as x."""
    if not training:
        # eval path: 1.0 * data — identity, no kernel launch.
        return x * jnp.asarray(1.0, dtype=x.dtype)

    orig_shape = x.shape
    total = x.size
    lane, rows, block_rows = _choose_layout(total)
    x2d = x.reshape(rows, lane)
    grid = (pl.cdiv(rows, block_rows),)

    if jax.default_backend() == "tpu":
        seed_arr = jnp.asarray([seed], dtype=jnp.int32)
        out2d = pl.pallas_call(
            _add_gaussian_kernel,
            out_shape=jax.ShapeDtypeStruct((rows, lane), x.dtype),
            grid_spec=pltpu.PrefetchScalarGridSpec(
                num_scalar_prefetch=1,
                grid=grid,
                in_specs=[pl.BlockSpec((block_rows, lane),
                                       lambda i, seed_ref: (i, 0))],
                out_specs=pl.BlockSpec((block_rows, lane),
                                       lambda i, seed_ref: (i, 0)),
            ),
            compiler_params=pltpu.CompilerParams(
                dimension_semantics=("parallel",)),
        )(seed_arr, x2d)
    else:
        # TPU PRNG primitives (prng_seed / stateful_normal) have no CPU lowering;
        # draw the noise with jax.random and do the tiled add in Pallas.
        key = jax.random.PRNGKey(seed)
        noise2d = (MEAN + SIGMA * jax.random.normal(key, (rows, lane),
                                                    dtype=jnp.float32)).astype(x.dtype)
        out2d = pl.pallas_call(
            _add_noise_kernel,
            out_shape=jax.ShapeDtypeStruct((rows, lane), x.dtype),
            grid=grid,
            in_specs=[pl.BlockSpec((block_rows, lane), lambda i: (i, 0)),
                      pl.BlockSpec((block_rows, lane), lambda i: (i, 0))],
            out_specs=pl.BlockSpec((block_rows, lane), lambda i: (i, 0)),
        )(x2d, noise2d)

    return out2d.reshape(orig_shape)


if __name__ == "__main__":
    key = jax.random.PRNGKey(0)
    x = jax.random.normal(key, (2, 4, 16, 16), dtype=jnp.float32)  # NCHW

    # training path: adds Gaussian noise
    y_train = jax.block_until_ready(add_gaussian(x, seed=42, training=True))
    assert y_train.shape == x.shape and y_train.dtype == x.dtype

    # sanity: noise = y - x should have roughly the requested mean/sigma
    noise = y_train - x
    assert abs(float(noise.mean()) - MEAN) < 0.05
    assert abs(float(noise.std()) - SIGMA) < 0.05

    # eval path: 1.0 * data
    y_eval = jax.block_until_ready(add_gaussian(x, seed=0, training=False))
    assert y_eval.shape == x.shape and y_eval.dtype == x.dtype
    assert jnp.allclose(y_eval, x)

    print("KERNEL_OK")
</pallas_src>

<mosaic_0001>
module attributes {stable_mosaic.version = 11 : i64} {
  func.func @_add_noise_kernel(%arg0: i32, %arg1: memref<2x1024xf32, #tpu.memory_space<vmem>>, %arg2: memref<2x1024xf32, #tpu.memory_space<vmem>>, %arg3: memref<2x1024xf32, #tpu.memory_space<vmem>>) attributes {dimension_semantics = [#tpu.dimension_semantics<arbitrary>], iteration_bounds = array<i64: 1>, scalar_prefetch = 0 : i64, scratch_operands = 0 : i64, tpu.core_type = #tpu.core_type<tc>, window_params = [{transform_indices = @transform_0, window_bounds = array<i64: 2, 1024>}, {transform_indices = @transform_1, window_bounds = array<i64: 2, 1024>}, {transform_indices = @transform_2, window_bounds = array<i64: 2, 1024>}]} {
    %c0 = arith.constant 0 : index
    %c0_0 = arith.constant 0 : index
    %0 = vector.load %arg1[%c0, %c0_0] : memref<2x1024xf32, #tpu.memory_space<vmem>>, vector<2x1024xf32>
    %c0_1 = arith.constant 0 : index
    %c0_2 = arith.constant 0 : index
    %1 = vector.load %arg2[%c0_1, %c0_2] : memref<2x1024xf32, #tpu.memory_space<vmem>>, vector<2x1024xf32>
    %2 = arith.addf %0, %1 : vector<2x1024xf32>
    %c0_3 = arith.constant 0 : index
    %c0_4 = arith.constant 0 : index
    %3 = vector.load %arg3[%c0_3, %c0_4] : memref<2x1024xf32, #tpu.memory_space<vmem>>, vector<2x1024xf32>
    tpu.vector_store %arg3[%c0_3, %c0_4], %2 {strides = array<i32>} : memref<2x1024xf32, #tpu.memory_space<vmem>>, vector<2x1024xf32>,
    return
  }
  func.func @transform_0(%arg0: i32) -> (i32, i32) {
    %c0_i32 = arith.constant 0 : i32
    %c0_i32_0 = arith.constant 0 : i32
    return %arg0, %c0_i32 : i32, i32
  }
  func.func @transform_1(%arg0: i32) -> (i32, i32) {
    %c0_i32 = arith.constant 0 : i32
    %c0_i32_0 = arith.constant 0 : i32
    return %arg0, %c0_i32 : i32, i32
  }
  func.func @transform_2(%arg0: i32) -> (i32, i32) {
    %c0_i32 = arith.constant 0 : i32
    %c0_i32_0 = arith.constant 0 : i32
    return %arg0, %c0_i32 : i32, i32
  }
}

</mosaic_0001>

<llo_original>
// kernel: tpu_custom_call.1
$region0: #{tpu_custom_call.1}
  #allocation0 [shape = 'u32[]', space=smem, size = 0x4, offset = 0x4, fixed_abs, tag = 'smem constant byte address 0x4 - core index']
  #allocation1 [shape = 'u32[144,128]{1,0:T(1,128)}', space=vmem, size = 0x12000, scoped, tag = 'internal scratch']
  %s0 = inlined_call_operand.hbm [shape: f32[2,1024], index: 0, kind: input, shape index: {}]
  %s1 = inlined_call_operand.hbm [shape: f32[2,1024], index: 1, kind: input, shape index: {}]
  %s2 = inlined_call_operand.hbm [shape: f32[2,1024], index: 2, kind: output, shape index: {}]
  %s3 = sld [smem:[#allocation0]]
  $region26: #{tpu_custom_call.1} parent=0
    _
  %s5 = ssub.s32 1, %s3
  %s6 = scalar_select 0, %s5, %s3
  $region1: #{tpu_custom_call.1} parent=0
    #allocation2 [shape = 'u8[8192]{0}', space=vmem, size = 0x2000, scoped, tag = 'input window, operand 0, single buffered']
    #allocation3 [shape = 's32[1]{0}', space=sflag, size = 0x4, scoped, tag = 'scoped memory for tpu_custom_call.1']
    #allocation4 [shape = 's32[1]{0}', space=sflag, size = 0x4, scoped, tag = 'scoped memory for tpu_custom_call.1']
    #allocation5 [shape = 'u8[8192]{0}', space=vmem, size = 0x2000, scoped, tag = 'input window, operand 1, single buffered']
    #allocation6 [shape = 's32[1]{0}', space=sflag, size = 0x4, scoped, tag = 'scoped memory for tpu_custom_call.1']
    #allocation7 [shape = 'u8[8192]{0}', space=vmem, size = 0x2000, scoped, tag = 'output window, operand 0, single buffered']
    %7 = vsyncpa [#allocation3], 0
    %8 = vsyncpa [#allocation6], 0
    %9 = vsyncpa [#allocation4], 0
    // Predicated region
    $region2: #{tpu_custom_call.1} parent=1 // pred_check
      _
    $region3: #{tpu_custom_call.1} parent=1 // pred_check_branch
      %11 = sbr.rel (0) target = $region5
    $region4: #{tpu_custom_call.1} parent=1 // pred_region
      %s13 = ssub.s32 256, 256
      %14 = vsyncadd [#allocation3], %s13
      %s16 = sshll.u32 [#allocation2], 4
      %s17 = int_to_ptr.vmem [resolvable:$true] %s16
      %19 = dma.hbm_to_vmem [thread:$0]  %s0, 256, %s17, [#allocation3]
    $region5: #{tpu_custom_call.1} parent=1 // pred_fallthru
      _
    // Predicated region
    $region6: #{tpu_custom_call.1} parent=1 // pred_check
      _
    $region7: #{tpu_custom_call.1} parent=1 // pred_check_branch
      %21 = sbr.rel (0) target = $region9
    $region8: #{tpu_custom_call.1} parent=1 // pred_region
      %s23 = ssub.s32 256, 256
      %24 = vsyncadd [#allocation6], %s23
      %s26 = sshll.u32 [#allocation5], 4
      %s27 = int_to_ptr.vmem [resolvable:$true] %s26
      %29 = dma.hbm_to_vmem [thread:$0]  %s1, 256, %s27, [#allocation6]
    $region9: #{tpu_custom_call.1} parent=1 // pred_fallthru
      _
    // Predicated region
    $region10: #{tpu_custom_call.1} parent=1 // pred_check
      _
    $region11: #{tpu_custom_call.1} parent=1 // pred_check_branch
      %31 = sbr.rel (0) target = $region13
    $region12: #{tpu_custom_call.1} parent=1 // pred_region
      %32 = dma.done [#allocation3], 256
    $region13: #{tpu_custom_call.1} parent=1 // pred_fallthru
      _
    // Predicated region
    $region14: #{tpu_custom_call.1} parent=1 // pred_check
      _
    $region15: #{tpu_custom_call.1} parent=1 // pred_check_branch
      %34 = sbr.rel (0) target = $region17
    $region16: #{tpu_custom_call.1} parent=1 // pred_region
      %35 = dma.done [#allocation6], 256
    $region17: #{tpu_custom_call.1} parent=1 // pred_fallthru
      _
    %v36 = vld [vmem:[#allocation2] sm:$0xff]
    %v37 = vld [vmem:[#allocation2 + $0x8] sm:$0xff]
    %v38 = vld [vmem:[#allocation5] sm:$0xff]
    %v39 = vld [vmem:[#allocation5 + $0x8] sm:$0xff]
    %v40 = vadd.f32 %v36, %v38
    %v41 = vadd.f32 %v37, %v39
    %42 = vst [vmem:[#allocation7] sm:$0xff] %v40
    %43 = vst [vmem:[#allocation7 + $0x8] sm:$0xff] %v41
    // Predicated region
    $region18: #{tpu_custom_call.1} parent=1 // pred_check
      _
    $region19: #{tpu_custom_call.1} parent=1 // pred_check_branch
      %45 = sbr.rel (0) target = $region21
    $region20: #{tpu_custom_call.1} parent=1 // pred_region
      %s47 = ssub.s32 256, 256
      %48 = vsyncadd [#allocation4], %s47
      %s50 = sshll.u32 [#allocation7], 4
      %s51 = int_to_ptr.vmem [resolvable:$true] %s50
      %53 = dma.vmem_to_hbm [thread:$0]  %s51, 256, %s2, [#allocation4]
    $region21: #{tpu_custom_call.1} parent=1 // pred_fallthru
      _
    // Predicated region
    $region22: #{tpu_custom_call.1} parent=1 // pred_check
      _
    $region23: #{tpu_custom_call.1} parent=1 // pred_check_branch
      %55 = sbr.rel (0) target = $region25
    $region24: #{tpu_custom_call.1} parent=1 // pred_region
      %56 = dma.done [#allocation4], 256
    $region25: #{tpu_custom_call.1} parent=1 // pred_fallthru
      _
    %57 = vsyncpa [#allocation3], 1
    %58 = vsyncpa [#allocation6], 1
    %59 = vsyncpa [#allocation4], 1

</llo_original>
